<compile_context>
chip_gen: v5e
topology: v5e:2x2
jax: 0.10.0
libtpu: 0.0.40
codegen_flags: <defaults>
</compile_context>

<pallas_src>
import functools

import jax
import jax.numpy as jnp
from jax.experimental import pallas as pl
from jax.experimental.pallas import tpu as pltpu

_LANE = 128
_SUBLANE = 8


def _round_up(a, b):
    return (a + b - 1) // b * b


def _dice_loss_kernel(x_ref, t_ref, union_ref, inter_ref, su_ref, si_ref, *,
                      tail_cols):
    """Streams (gb, hw_chunk) tiles; accumulates per-row sum(p+t), sum(p*t)."""
    j = pl.program_id(1)                 # spatial chunk index (reduction axis)
    last = pl.num_programs(1) - 1

    @pl.when(j == 0)
    def _():
        su_ref[...] = jnp.zeros_like(su_ref)
        si_ref[...] = jnp.zeros_like(si_ref)

    # Tiles arrive in native dtype; compute in f32 to match the reference.
    x = x_ref[...].astype(jnp.float32)   # (gb, hw_chunk)
    t = t_ref[...].astype(jnp.float32)   # (gb, hw_chunk)

    def accumulate(p, tt):
        su_ref[...] += jnp.sum(p + tt, axis=1, keepdims=True)   # union partial
        si_ref[...] += jnp.sum(p * tt, axis=1, keepdims=True)   # inter partial

    if tail_cols:
        # Only the LAST chunk contains out-of-bounds (unspecified) columns;
        # mask both p and t there.  Other chunks run the cheap path.
        @pl.when(j < last)
        def _():
            accumulate(jax.nn.sigmoid(x), t)

        @pl.when(j == last)
        def _():
            col = jax.lax.broadcasted_iota(jnp.int32, x.shape, 1)
            mask = col < tail_cols
            accumulate(jnp.where(mask, jax.nn.sigmoid(x), 0.0),
                       jnp.where(mask, t, 0.0))
    else:
        accumulate(jax.nn.sigmoid(x), t)

    @pl.when(j == last)
    def _():
        union_ref[0] = su_ref[...]
        inter_ref[0] = si_ref[...]


def dice_loss(inputs, targets, eps=1e-6, *, block_bytes=4 << 20):
    """Pallas TPU implementation of DiceLoss.forward.  Returns a scalar."""
    assert inputs.shape == targets.shape
    N, C, H, W = inputs.shape
    HW = H * W
    NC = N * C

    itemsize = max(inputs.dtype.itemsize, targets.dtype.itemsize)

    # ---- fold a spatial factor r into the row axis when N*C is small, so
    #      sublanes are dense and the parallel row axis has >= 2 blocks. ----
    r = 1
    if NC < 2 * _SUBLANE:
        for cand in range(1, min(HW, 4 * _SUBLANE) + 1):
            if HW % cand == 0 and HW // cand >= _LANE:
                r = cand
                if NC * cand >= 2 * _SUBLANE:
                    break
    NC_rows = NC * r
    HW_row = HW // r

    # Zero-copy views in NATIVE dtype (no f32 materialization, no padding).
    x = inputs.reshape(NC_rows, HW_row)
    t = targets.reshape(NC_rows, HW_row)

    # ---- row-block size gb: full axis, or a multiple of 8 aiming for >= 2
    #      row blocks (megacore on v7x); capped by VMEM budget. ----
    gb_cap = max(_SUBLANE,
                 (block_bytes // (_LANE * itemsize)) // _SUBLANE * _SUBLANE)
    if NC_rows <= _SUBLANE:
        gb = NC_rows
    else:
        gb = _round_up(pl.cdiv(NC_rows, 2), _SUBLANE)
        gb = min(gb, gb_cap)
    num_g = pl.cdiv(NC_rows, gb)

    # ---- spatial chunk: ~block_bytes per input block, chosen to (nearly)
    #      divide HW_row (multiple of 128, or the full axis).  The ragged
    #      tail of the last chunk is masked in-kernel, never padded in HBM. ----
    gb_pad = _round_up(gb, _SUBLANE)
    target_cols = max(_LANE,
                      (block_bytes // (gb_pad * itemsize)) // _LANE * _LANE)
    if target_cols >= HW_row:
        hw_chunk, num_hw, tail_cols = HW_row, 1, 0
    else:
        num_hw = pl.cdiv(HW_row, target_cols)
        hw_chunk = _round_up(pl.cdiv(HW_row, num_hw), _LANE)
        num_hw = pl.cdiv(HW_row, hw_chunk)
        tail = HW_row - (num_hw - 1) * hw_chunk
        tail_cols = 0 if tail == hw_chunk else tail

    # 2 inputs x 2 pipeline buffers; explicit limit keeps v5e (16 MiB default
    # scoped VMEM) happy and stays under v7x's 64 MiB physical VMEM.
    in_block_bytes = gb_pad * hw_chunk * itemsize
    vmem_limit = int(min(max(4 * in_block_bytes + (8 << 20), 16 << 20),
                         60 << 20))

    kernel = functools.partial(_dice_loss_kernel, tail_cols=int(tail_cols))

    union_out, inter_out = pl.pallas_call(
        kernel,
        out_shape=(
            jax.ShapeDtypeStruct((num_g, gb, 1), jnp.float32),
            jax.ShapeDtypeStruct((num_g, gb, 1), jnp.float32),
        ),
        grid_spec=pltpu.PrefetchScalarGridSpec(
            num_scalar_prefetch=0,
            grid=(num_g, num_hw),
            in_specs=[
                pl.BlockSpec((gb, hw_chunk), lambda g, j: (g, j)),
                pl.BlockSpec((gb, hw_chunk), lambda g, j: (g, j)),
            ],
            out_specs=[
                pl.BlockSpec((1, gb, 1), lambda g, j: (g, 0, 0)),
                pl.BlockSpec((1, gb, 1), lambda g, j: (g, 0, 0)),
            ],
            scratch_shapes=[
                pltpu.VMEM((gb, 1), jnp.float32),   # sum(p) + sum(t)
                pltpu.VMEM((gb, 1), jnp.float32),   # sum(p * t)
            ],
        ),
        compiler_params=pltpu.CompilerParams(
            # row-block axis independent (shards across TCs on v7x); the
            # spatial axis carries the partial-sum accumulators.
            dimension_semantics=("parallel", "arbitrary"),
            vmem_limit_bytes=vmem_limit,
        ),
    )(x, t)

    # Tiny O(N*C*r) epilogue in plain JAX: drop ragged rows, undo the spatial
    # fold, apply eps + division, channel mean, batch mean (reference order).
    union = union_out.reshape(-1)[:NC_rows].reshape(N, C, r).sum(axis=2)
    inter = inter_out.reshape(-1)[:NC_rows].reshape(N, C, r).sum(axis=2)
    dice = (2.0 * inter + float(eps)) / (union + float(eps))
    return jnp.mean(1.0 - jnp.mean(dice, axis=1))


def _dice_loss_ref(inputs, targets, eps=1e-6):
    p = jax.nn.sigmoid(inputs.astype(jnp.float32))
    t = targets.astype(jnp.float32)
    inter = jnp.sum(p * t, axis=(2, 3))
    union = jnp.sum(p, axis=(2, 3)) + jnp.sum(t, axis=(2, 3))
    dice = (2.0 * inter + eps) / (union + eps)
    return jnp.mean(1.0 - jnp.mean(dice, axis=1))


if __name__ == "__main__":
    key = jax.random.PRNGKey(0)
    k1, k2 = jax.random.split(key)

    N, C, H, W = 2, 4, 16, 16
    inputs = jax.random.normal(k1, (N, C, H, W), dtype=jnp.float32)       # logits
    targets = (jax.random.uniform(k2, (N, C, H, W)) > 0.5).astype(jnp.float32)

    loss = dice_loss(inputs, targets)
    jax.block_until_ready(loss)

    ref = _dice_loss_ref(inputs, targets)
    assert jnp.allclose(loss, ref, atol=1e-5, rtol=1e-5), (loss, ref)

    print("KERNEL_OK")
</pallas_src>

<mosaic_0001>
module attributes {stable_mosaic.version = 11 : i64} {
  func.func @_dice_loss_kernel(%arg0: i32, %arg1: i32, %arg2: memref<8x128xf32, #tpu.memory_space<vmem>>, %arg3: memref<8x128xf32, #tpu.memory_space<vmem>>, %arg4: memref<1x8x1xf32, #tpu.memory_space<vmem>>, %arg5: memref<1x8x1xf32, #tpu.memory_space<vmem>>, %arg6: memref<8x1xf32, #tpu.memory_space<vmem>>, %arg7: memref<8x1xf32, #tpu.memory_space<vmem>>) attributes {dimension_semantics = [#tpu.dimension_semantics<parallel>, #tpu.dimension_semantics<arbitrary>], iteration_bounds = array<i64: 2, 1>, scalar_prefetch = 0 : i64, scratch_operands = 2 : i64, tpu.core_type = #tpu.core_type<tc>, window_params = [{transform_indices = @transform_0, window_bounds = array<i64: 8, 128>}, {transform_indices = @transform_1, window_bounds = array<i64: 8, 128>}, {transform_indices = @transform_2, window_bounds = array<i64: 1, 8, 1>}, {transform_indices = @transform_3, window_bounds = array<i64: 1, 8, 1>}]} {
    %c0_i32 = arith.constant 0 : i32
    %0 = arith.cmpi eq, %arg1, %c0_i32 : i32
    %1 = arith.extui %0 : i1 to i32
    %c0_i32_0 = arith.constant 0 : i32
    %2 = arith.cmpi ne, %1, %c0_i32_0 : i32
    scf.if %2 {
      %cst_16 = arith.constant 0.000000e+00 : f32
      %25 = vector.broadcast %cst_16 : f32 to vector<8x1xf32>
      %c0_17 = arith.constant 0 : index
      %c0_18 = arith.constant 0 : index
      %26 = vector.load %arg6[%c0_17, %c0_18] : memref<8x1xf32, #tpu.memory_space<vmem>>, vector<8x1xf32>
      tpu.vector_store %arg6[%c0_17, %c0_18], %25 {strides = array<i32>} : memref<8x1xf32, #tpu.memory_space<vmem>>, vector<8x1xf32>,
      %cst_19 = arith.constant 0.000000e+00 : f32
      %27 = vector.broadcast %cst_19 : f32 to vector<8x1xf32>
      %c0_20 = arith.constant 0 : index
      %c0_21 = arith.constant 0 : index
      %28 = vector.load %arg7[%c0_20, %c0_21] : memref<8x1xf32, #tpu.memory_space<vmem>>, vector<8x1xf32>
      tpu.vector_store %arg7[%c0_20, %c0_21], %27 {strides = array<i32>} : memref<8x1xf32, #tpu.memory_space<vmem>>, vector<8x1xf32>,
    } else {
    }
    %c0 = arith.constant 0 : index
    %c0_1 = arith.constant 0 : index
    %3 = vector.load %arg2[%c0, %c0_1] : memref<8x128xf32, #tpu.memory_space<vmem>>, vector<8x128xf32>
    %c0_2 = arith.constant 0 : index
    %c0_3 = arith.constant 0 : index
    %4 = vector.load %arg3[%c0_2, %c0_3] : memref<8x128xf32, #tpu.memory_space<vmem>>, vector<8x128xf32>
    %5 = arith.negf %3 : vector<8x128xf32>
    %6 = math.exp %5 : vector<8x128xf32>
    %cst = arith.constant 1.000000e+00 : f32
    %7 = vector.broadcast %cst : f32 to vector<8x128xf32>
    %8 = arith.addf %7, %6 : vector<8x128xf32>
    %9 = arith.divf %7, %8 : vector<8x128xf32>
    %c0_4 = arith.constant 0 : index
    %c0_5 = arith.constant 0 : index
    %10 = vector.load %arg6[%c0_4, %c0_5] : memref<8x1xf32, #tpu.memory_space<vmem>>, vector<8x1xf32>
    %11 = arith.addf %9, %4 : vector<8x128xf32>
    %cst_6 = arith.constant dense<0.000000e+00> : vector<8xf32>
    %12 = vector.multi_reduction <add>, %11, %cst_6 [1] : vector<8x128xf32> to vector<8xf32>
    %13 = vector.shape_cast %12 : vector<8xf32> to vector<8x1xf32>
    %14 = arith.addf %10, %13 : vector<8x1xf32>
    %c0_7 = arith.constant 0 : index
    %c0_8 = arith.constant 0 : index
    %15 = vector.load %arg6[%c0_7, %c0_8] : memref<8x1xf32, #tpu.memory_space<vmem>>, vector<8x1xf32>
    tpu.vector_store %arg6[%c0_7, %c0_8], %14 {strides = array<i32>} : memref<8x1xf32, #tpu.memory_space<vmem>>, vector<8x1xf32>,
    %c0_9 = arith.constant 0 : index
    %c0_10 = arith.constant 0 : index
    %16 = vector.load %arg7[%c0_9, %c0_10] : memref<8x1xf32, #tpu.memory_space<vmem>>, vector<8x1xf32>
    %17 = arith.mulf %9, %4 : vector<8x128xf32>
    %cst_11 = arith.constant dense<0.000000e+00> : vector<8xf32>
    %18 = vector.multi_reduction <add>, %17, %cst_11 [1] : vector<8x128xf32> to vector<8xf32>
    %19 = vector.shape_cast %18 : vector<8xf32> to vector<8x1xf32>
    %20 = arith.addf %16, %19 : vector<8x1xf32>
    %c0_12 = arith.constant 0 : index
    %c0_13 = arith.constant 0 : index
    %21 = vector.load %arg7[%c0_12, %c0_13] : memref<8x1xf32, #tpu.memory_space<vmem>>, vector<8x1xf32>
    tpu.vector_store %arg7[%c0_12, %c0_13], %20 {strides = array<i32>} : memref<8x1xf32, #tpu.memory_space<vmem>>, vector<8x1xf32>,
    %c0_i32_14 = arith.constant 0 : i32
    %22 = arith.cmpi eq, %arg1, %c0_i32_14 : i32
    %23 = arith.extui %22 : i1 to i32
    %c0_i32_15 = arith.constant 0 : i32
    %24 = arith.cmpi ne, %23, %c0_i32_15 : i32
    scf.if %24 {
      %c0_16 = arith.constant 0 : index
      %c0_17 = arith.constant 0 : index
      %25 = vector.load %arg6[%c0_16, %c0_17] : memref<8x1xf32, #tpu.memory_space<vmem>>, vector<8x1xf32>
      %c0_18 = arith.constant 0 : index
      %c0_19 = arith.constant 0 : index
      %c0_20 = arith.constant 0 : index
      %26 = vector.load %arg4[%c0_18, %c0_19, %c0_20] : memref<1x8x1xf32, #tpu.memory_space<vmem>>, vector<1x8x1xf32>
      %27 = vector.shape_cast %26 : vector<1x8x1xf32> to vector<8x1xf32>
      %28 = vector.shape_cast %25 : vector<8x1xf32> to vector<1x8x1xf32>
      tpu.vector_store %arg4[%c0_18, %c0_19, %c0_20], %28 {strides = array<i32>} : memref<1x8x1xf32, #tpu.memory_space<vmem>>, vector<1x8x1xf32>,
      %c0_21 = arith.constant 0 : index
      %c0_22 = arith.constant 0 : index
      %29 = vector.load %arg7[%c0_21, %c0_22] : memref<8x1xf32, #tpu.memory_space<vmem>>, vector<8x1xf32>
      %c0_23 = arith.constant 0 : index
      %c0_24 = arith.constant 0 : index
      %c0_25 = arith.constant 0 : index
      %30 = vector.load %arg5[%c0_23, %c0_24, %c0_25] : memref<1x8x1xf32, #tpu.memory_space<vmem>>, vector<1x8x1xf32>
      %31 = vector.shape_cast %30 : vector<1x8x1xf32> to vector<8x1xf32>
      %32 = vector.shape_cast %29 : vector<8x1xf32> to vector<1x8x1xf32>
      tpu.vector_store %arg5[%c0_23, %c0_24, %c0_25], %32 {strides = array<i32>} : memref<1x8x1xf32, #tpu.memory_space<vmem>>, vector<1x8x1xf32>,
    } else {
    }
    return
  }
  func.func @transform_0(%arg0: i32, %arg1: i32) -> (i32, i32) {
    %c0_i32 = arith.constant 0 : i32
    return %arg0, %arg1 : i32, i32
  }
  func.func @transform_1(%arg0: i32, %arg1: i32) -> (i32, i32) {
    %c0_i32 = arith.constant 0 : i32
    return %arg0, %arg1 : i32, i32
  }
  func.func @transform_2(%arg0: i32, %arg1: i32) -> (i32, i32, i32) {
    %c0_i32 = arith.constant 0 : i32
    %c0_i32_0 = arith.constant 0 : i32
    %c0_i32_1 = arith.constant 0 : i32
    return %arg0, %c0_i32, %c0_i32_0 : i32, i32, i32
  }
  func.func @transform_3(%arg0: i32, %arg1: i32) -> (i32, i32, i32) {
    %c0_i32 = arith.constant 0 : i32
    %c0_i32_0 = arith.constant 0 : i32
    %c0_i32_1 = arith.constant 0 : i32
    return %arg0, %c0_i32, %c0_i32_0 : i32, i32, i32
  }
}

</mosaic_0001>

<llo_original>
// kernel: tpu_custom_call.1
$region0: #{tpu_custom_call.1}
  #allocation0 [shape = 'u32[]', space=smem, size = 0x4, offset = 0x4, fixed_abs, tag = 'smem constant byte address 0x4 - core index']
  #allocation1 [shape = 'u32[72,128]{1,0:T(1,128)}', space=vmem, size = 0x9000, scoped, tag = 'internal scratch']
  #allocation2 [shape = 'f32[8,1]{1,0:T(8,128)}', space=vmem, size = 0x1000, scoped, tag = 'scratch operand']
  #allocation3 [shape = 'f32[8,1]{1,0:T(8,128)}', space=vmem, size = 0x1000, scoped, tag = 'scratch operand']
  %s0 = inlined_call_operand.hbm [shape: f32[16,128], index: 0, kind: input, shape index: {}]
  %s1 = inlined_call_operand.hbm [shape: f32[16,128], index: 1, kind: input, shape index: {}]
  %s2 = inlined_call_operand.vmem [shape: f32[2,8,1], index: 2, kind: output, shape index: {0}]
  %s3 = inlined_call_operand.vmem [shape: f32[2,8,1], index: 3, kind: output, shape index: {1}]
  %4 = xla_tuple %s2, %s3
  %s5 = sld [smem:[#allocation0]]
  $region65: #{tpu_custom_call.1} parent=0
    _
  %s7 = ssub.s32 1, %s5
  %s8 = scalar_select 0, %s7, %s5
  $region1: #{tpu_custom_call.1} parent=0
    #allocation4 [shape = 'u8[8192]{0}', space=vmem, size = 0x2000, scoped, tag = 'input window, operand 0']
    #allocation5 [shape = 's32[2]{0}', space=sflag, size = 0x8, scoped, tag = 'scoped memory for tpu_custom_call.1']
    #allocation6 [shape = 'u8[8192]{0}', space=vmem, size = 0x2000, scoped, tag = 'input window, operand 1']
    #allocation7 [shape = 's32[2]{0}', space=sflag, size = 0x8, scoped, tag = 'scoped memory for tpu_custom_call.1']
    %9 = vsyncpa [#allocation5], 0
    %s10 = scalar_lea.sflag [#allocation5], 1
    %11 = vsyncpa %s10, 0
    %12 = vsyncpa [#allocation7], 0
    %s13 = scalar_lea.sflag [#allocation7], 1
    %14 = vsyncpa %s13, 0
    loop: start=0, step=1, limit=4
    $region2: #{tpu_custom_call.1} parent=1 // loop_pre_header
      _
    $region3: #{tpu_custom_call.1} parent=1 // loop_header
      %s16 = sphi 0, %s20
      %p17 = scmp.ge.s32.totalorder %s16, 4
      %s23 = sphi 0, %s35
      %s24 = sphi 0, %s31
      %s25 = sphi 0, %s23
      %s26 = sphi 0, %s24
      %s27 = sphi 0, %s25
      %s28 = sphi 0, %s26
      %s40 = sphi 0, %s42
      %s43 = sphi 0, %s40
      %s44 = sphi 0, %s43
      %s60 = sphi 0, %s44
      %s68 = sphi 0, %s70
      %s71 = sphi 0, %s68
      %s72 = sphi 0, %s71
      %s88 = sphi 0, %s72
      %s94 = sphi 0, %s96
      %s97 = sphi 0, %s94
      %s98 = sphi 0, %s97
      %s114 = sphi 0, %s98
      %s120 = sphi 0, %s122
      %s123 = sphi 0, %s120
      %s124 = sphi 0, %s123
      %s140 = sphi 0, %s124
    $region4: #{tpu_custom_call.1} parent=1 // loop_header_branch
      %19 = sbr.rel (%p17) target = $region8
    $region5: #{tpu_custom_call.1} parent=1 // loop_body
      %s21 = ssub.s32 %s16, 1
      %s22 = ssub.s32 %s16, 2
      %s29 = sadd.s32 1, %s24
      %p30 = scmp.ge.s32.totalorder %s29, 1
      %s31 = scalar_select %p30, 0, %s29
      %s32 = sadd.s32 1, %s23
      %s33 = scalar_select %p30, %s32, %s23
      %p34 = scmp.ge.s32.totalorder %s33, 2
      %s35 = scalar_select %p34, 0, %s33
      %s36 = ssub.s32 %s23, %s35
      %s37 = ssub.s32 %s24, %s31
      %s38 = sor.u32 %s36, %s37
      %p39 = scmp.eq.s32.totalorder %s38, 0
      %s41 = sadd.s32 %s40, 1
      %s42 = scalar_select %p39, %s40, %s41
      %p45 = pneg %p39
      %p46 = scmp.eq.s32.totalorder %s16, 1
      %p47 = por %p45, %p46
      %p48 = scmp.ne.s32.totalorder %s40, %s43
      %p49 = scmp.eq.s32.totalorder %s16, 0
      %p50 = por %p48, %p49
      %p51 = scmp.ne.s32.totalorder %s40, %s43
      %p52 = scmp.eq.s32.totalorder %s21, 1
      %p53 = por %p51, %p52
      %p54 = scmp.ne.s32.totalorder %s43, %s44
      %p55 = scmp.eq.s32.totalorder %s21, 0
      %p56 = por %p54, %p55
      %p57 = scmp.ne.s32.totalorder %s43, %s44
      %p58 = scmp.eq.s32.totalorder %s22, 1
      %p59 = por %p57, %p58
      %p61 = scmp.ne.s32.totalorder %s44, %s60
      %p62 = scmp.eq.s32.totalorder %s22, 0
      %p63 = por %p61, %p62
      %s64 = ssub.s32 %s23, %s35
      %s65 = ssub.s32 %s24, %s31
      %s66 = sor.u32 %s64, %s65
      %p67 = scmp.eq.s32.totalorder %s66, 0
      %s69 = sadd.s32 %s68, 1
      %s70 = scalar_select %p67, %s68, %s69
      %p73 = pneg %p67
      %p74 = scmp.eq.s32.totalorder %s16, 1
      %p75 = por %p73, %p74
      %p76 = scmp.ne.s32.totalorder %s68, %s71
      %p77 = scmp.eq.s32.totalorder %s16, 0
      %p78 = por %p76, %p77
      %p79 = scmp.ne.s32.totalorder %s68, %s71
      %p80 = scmp.eq.s32.totalorder %s21, 1
      %p81 = por %p79, %p80
      %p82 = scmp.ne.s32.totalorder %s71, %s72
      %p83 = scmp.eq.s32.totalorder %s21, 0
      %p84 = por %p82, %p83
      %p85 = scmp.ne.s32.totalorder %s71, %s72
      %p86 = scmp.eq.s32.totalorder %s22, 1
      %p87 = por %p85, %p86
      %p89 = scmp.ne.s32.totalorder %s72, %s88
      %p90 = scmp.eq.s32.totalorder %s22, 0
      %p91 = por %p89, %p90
      %s92 = ssub.s32 %s23, %s35
      %p93 = scmp.eq.s32.totalorder %s92, 0
      %s95 = sadd.s32 %s94, 1
      %s96 = scalar_select %p93, %s94, %s95
      %p99 = pneg %p93
      %p100 = scmp.eq.s32.totalorder %s16, 1
      %p101 = por %p99, %p100
      %p102 = scmp.ne.s32.totalorder %s94, %s97
      %p103 = scmp.eq.s32.totalorder %s16, 0
      %p104 = por %p102, %p103
      %p105 = scmp.ne.s32.totalorder %s94, %s97
      %p106 = scmp.eq.s32.totalorder %s21, 1
      %p107 = por %p105, %p106
      %p108 = scmp.ne.s32.totalorder %s97, %s98
      %p109 = scmp.eq.s32.totalorder %s21, 0
      %p110 = por %p108, %p109
      %p111 = scmp.ne.s32.totalorder %s97, %s98
      %p112 = scmp.eq.s32.totalorder %s22, 1
      %p113 = por %p111, %p112
      %p115 = scmp.ne.s32.totalorder %s98, %s114
      %p116 = scmp.eq.s32.totalorder %s22, 0
      %p117 = por %p115, %p116
      %s118 = ssub.s32 %s23, %s35
      %p119 = scmp.eq.s32.totalorder %s118, 0
      %s121 = sadd.s32 %s120, 1
      %s122 = scalar_select %p119, %s120, %s121
      %p125 = pneg %p119
      %p126 = scmp.eq.s32.totalorder %s16, 1
      %p127 = por %p125, %p126
      %p128 = scmp.ne.s32.totalorder %s120, %s123
      %p129 = scmp.eq.s32.totalorder %s16, 0
      %p130 = por %p128, %p129
      %p131 = scmp.ne.s32.totalorder %s120, %s123
      %p132 = scmp.eq.s32.totalorder %s21, 1
      %p133 = por %p131, %p132
      %p134 = scmp.ne.s32.totalorder %s123, %s124
      %p135 = scmp.eq.s32.totalorder %s21, 0
      %p136 = por %p134, %p135
      %p137 = scmp.ne.s32.totalorder %s123, %s124
      %p138 = scmp.eq.s32.totalorder %s22, 1
      %p139 = por %p137, %p138
      %p141 = scmp.ne.s32.totalorder %s124, %s140
      %p142 = scmp.eq.s32.totalorder %s22, 0
      %p143 = por %p141, %p142
      %p144 = scmp.le.s32.totalorder 1, %s16
      %p145 = scmp.lt.s32.totalorder %s16, 3
      %p146 = pnand %p144, %p145
      %p147 = pneg %p146
      // Predicated region
      $region9: #{tpu_custom_call.1} parent=5 // pred_check
        _
      $region10: #{tpu_custom_call.1} parent=5 // pred_check_branch
        %149 = sbr.rel (%p146) target = $region12
      $region11: #{tpu_custom_call.1} parent=5 // pred_region
        %s150 = ssub.s32 %s16, 1
      $region12: #{tpu_custom_call.1} parent=5 // pred_fallthru
        _
      %p151 = scmp.lt.s32.totalorder %s16, 2
      // Predicated region
      $region13: #{tpu_custom_call.1} parent=5 // pred_check
        %p152 = pneg %p151
      $region14: #{tpu_custom_call.1} parent=5 // pred_check_branch
        %154 = sbr.rel (%p152) target = $region16
      $region15: #{tpu_custom_call.1} parent=5 // pred_region
        // Predicated region
        $region17: #{tpu_custom_call.1} parent=15 // pred_check
          %p155 = pneg %p50
        $region18: #{tpu_custom_call.1} parent=15 // pred_check_branch
          %157 = sbr.rel (%p155) target = $region20
        $region19: #{tpu_custom_call.1} parent=15 // pred_region
          %s158 = sand.u32 %s40, 1
          %s159 = scalar_lea.sflag [#allocation5], %s158
          %s160 = sand.u32 %s40, 1
          %s161 = smul.addr %s160, 8
          %s162 = scalar_lea.vmem [#allocation4], %s161
          %164 = vsyncadd %s159, 0
          %s165 = sadd.s32 %s24, %s23
          %s166 = smul.addr %s165, 8
          %s167 = scalar_lea.hbm %s0, %s166
          %s169 = sshll.u32 %s167, 4
          %s170 = int_to_ptr.hbm [resolvable:$true] %s169
          %s171 = sshll.u32 %s162, 4
          %s172 = int_to_ptr.vmem [resolvable:$true] %s171
          %174 = dma.hbm_to_vmem [thread:$0]  %s170, 128, %s172, %s159
        $region20: #{tpu_custom_call.1} parent=15 // pred_fallthru
          _
        // Predicated region
        $region21: #{tpu_custom_call.1} parent=15 // pred_check
          %p175 = pneg %p78
        $region22: #{tpu_custom_call.1} parent=15 // pred_check_branch
          %177 = sbr.rel (%p175) target = $region24
        $region23: #{tpu_custom_call.1} parent=15 // pred_region
          %s178 = sand.u32 %s68, 1
          %s179 = scalar_lea.sflag [#allocation7], %s178
          %s180 = sand.u32 %s68, 1
          %s181 = smul.addr %s180, 8
          %s182 = scalar_lea.vmem [#allocation6], %s181
          %184 = vsyncadd %s179, 0
          %s185 = sadd.s32 %s24, %s23
          %s186 = smul.addr %s185, 8
          %s187 = scalar_lea.hbm %s1, %s186
          %s189 = sshll.u32 %s187, 4
          %s190 = int_to_ptr.hbm [resolvable:$true] %s189
          %s191 = sshll.u32 %s182, 4
          %s192 = int_to_ptr.vmem [resolvable:$true] %s191
          %194 = dma.hbm_to_vmem [thread:$0]  %s190, 128, %s192, %s179
        $region24: #{tpu_custom_call.1} parent=15 // pred_fallthru
          _
      $region16: #{tpu_custom_call.1} parent=5 // pred_fallthru
        _
      %p195 = scmp.le.s32.totalorder 1, %s16
      %p196 = scmp.lt.s32.totalorder %s16, 3
      %p197 = pnand %p195, %p196
      %p198 = pneg %p197
      // Predicated region
      $region25: #{tpu_custom_call.1} parent=5 // pred_check
        _
      $region26: #{tpu_custom_call.1} parent=5 // pred_check_branch
        %200 = sbr.rel (%p197) target = $region28
      $region27: #{tpu_custom_call.1} parent=5 // pred_region
        %s201 = ssub.s32 %s16, 1
        %s202 = sand.u32 %s43, 1
        %s203 = scalar_lea.sflag [#allocation5], %s202
        %s204 = sand.u32 %s43, 1
        %s205 = smul.addr %s204, 8
        %s206 = scalar_lea.vmem [#allocation4], %s205
        // Predicated region
        $region29: #{tpu_custom_call.1} parent=27 // pred_check
          %p207 = pneg %p56
        $region30: #{tpu_custom_call.1} parent=27 // pred_check_branch
          %209 = sbr.rel (%p207) target = $region32
        $region31: #{tpu_custom_call.1} parent=27 // pred_region
          %211 = dma.done %s203, 128
        $region32: #{tpu_custom_call.1} parent=27 // pred_fallthru
          _
        %s212 = sand.u32 %s71, 1
        %s213 = scalar_lea.sflag [#allocation7], %s212
        %s214 = sand.u32 %s71, 1
        %s215 = smul.addr %s214, 8
        %s216 = scalar_lea.vmem [#allocation6], %s215
        // Predicated region
        $region33: #{tpu_custom_call.1} parent=27 // pred_check
          %p217 = pneg %p84
        $region34: #{tpu_custom_call.1} parent=27 // pred_check_branch
          %219 = sbr.rel (%p217) target = $region36
        $region35: #{tpu_custom_call.1} parent=27 // pred_region
          %221 = dma.done %s213, 128
        $region36: #{tpu_custom_call.1} parent=27 // pred_fallthru
          _
        %s222 = sand.u32 %s43, 1
        %s223 = scalar_lea.sflag [#allocation5], %s222
        %s224 = sand.u32 %s43, 1
        %s225 = smul.addr %s224, 8
        %s226 = scalar_lea.vmem [#allocation4], %s225
        %p227 = pneg %p56
        %p228 = pneg %p53
        %s229 = sand.u32 %s71, 1
        %s230 = scalar_lea.sflag [#allocation7], %s229
        %s231 = sand.u32 %s71, 1
        %s232 = smul.addr %s231, 8
        %s233 = scalar_lea.vmem [#allocation6], %s232
        %p234 = pneg %p84
        %p235 = pneg %p81
        %p236 = pneg %p110
        %p237 = pneg %p107
        %p238 = scmp.lt.s32.totalorder %s25, 1
        %s239 = scalar_select %p238, %s25, 1
        %s240 = smul.addr %s239, 8
        %s241 = scalar_lea.vmem %s2, %s240
        %p242 = pneg %p136
        %p243 = pneg %p133
        %p244 = scmp.lt.s32.totalorder %s25, 1
        %s245 = scalar_select %p244, %s25, 1
        %s246 = smul.addr %s245, 8
        %s247 = scalar_lea.vmem %s3, %s246
        %p248 = scmp.lt.s32.totalorder %s25, 1
        %s249 = scalar_select %p248, %s25, 1
        %s250 = smul.addr %s249, 8
        %s251 = scalar_lea.vmem %s2, %s250
        %p252 = scmp.lt.s32.totalorder %s25, 1
        %s253 = scalar_select %p252, %s25, 1
        %s254 = smul.addr %s253, 8
        %s255 = scalar_lea.vmem %s3, %s254
        %p256 = scmp.eq.s32.totalorder %s26, 0
        // Predicated region
        $region37: #{tpu_custom_call.1} parent=27 // pred_check
          %p257 = pneg %p256
        $region38: #{tpu_custom_call.1} parent=27 // pred_check_branch
          %259 = sbr.rel (%p257) target = $region40
        $region39: #{tpu_custom_call.1} parent=27 // pred_region
          %vm260 = vcmask 7168
          %261 = vst.msk [vmem:[#allocation2] sm:$0xff] %vm260, 0.0
          %262 = vst.msk [vmem:[#allocation3] sm:$0xff] %vm260, 0.0
        $region40: #{tpu_custom_call.1} parent=27 // pred_fallthru
          _
        %v263 = vld [vmem:[%s206] sm:$0xff]
        %v264 = vld [vmem:[%s216] sm:$0xff]
        %v265 = vxor.u32 %v263, 2147483648
        %v266 = vmul.f32 %v265, 1.442695
        %v267 = vpow.pop %v266
        %v268 = vadd.f32 %v267, 1.0
        %v269 = vrcp.pop %v268
        %v270 = vmul.f32 %v268, %v269
        %v271 = vsub.f32 1.0, %v270
        %v272 = vmul.f32 %v269, %v271
        %v273 = vadd.f32 %v269, %v272
        %vm274 = vweird.f32 %v268
        %vm275 = vweird.f32 %v269
        %vm276 = vmor %vm274, %vm275
        %v277 = vsel %vm276, %v269, %v273
        %v278 = vand.u32 2147483647, %v268
        %vm279 = vcmp.eq.f32.partialorder %v278, 8.507059e+37
        %v280 = vand.u32 %v268, 2147483648
        %v281 = vor.u32 1.1754944e-38, %v280
        %v282 = vsel %vm279, %v281, %v277
        %v283 = vmul.f32 1.0, %v282
        %v284 = vld [vmem:[#allocation2] sm:$0xff]
        %v285 = vadd.f32 %v283, %v264
        %286 = vadd.xlane.f32.xlu0 %v285
        %v287 = vpop.xlane.xlu0 %286
        %v288 = vadd.f32 %v284, %v287
        %vm289 = vcmask 7168
        %290 = vst.msk [vmem:[#allocation2] sm:$0xff] %vm289, %v288
        %v291 = vld [vmem:[#allocation3] sm:$0xff]
        %v292 = vmul.f32 %v283, %v264
        %293 = vadd.xlane.f32.xlu0 %v292
        %v294 = vpop.xlane.xlu0 %293
        %v295 = vadd.f32 %v291, %v294
        %296 = vst.msk [vmem:[#allocation3] sm:$0xff] %vm289, %v295
        // Predicated region
        $region41: #{tpu_custom_call.1} parent=27 // pred_check
          %p297 = pneg %p256
        $region42: #{tpu_custom_call.1} parent=27 // pred_check_branch
          %299 = sbr.rel (%p297) target = $region44
        $region43: #{tpu_custom_call.1} parent=27 // pred_region
          %v300 = vld [vmem:[#allocation2] sm:$0xff]
          %301 = vst.msk [vmem:[%s251] sm:$0xff] %vm289, %v300
          %v302 = vld [vmem:[#allocation3] sm:$0xff]
          %303 = vst.msk [vmem:[%s255] sm:$0xff] %vm289, %v302
        $region44: #{tpu_custom_call.1} parent=27 // pred_fallthru
          _
        %p304 = scmp.lt.s32.totalorder %s25, 1
        %s305 = scalar_select %p304, %s25, 1
        %s306 = smul.addr %s305, 8
        %s307 = scalar_lea.vmem %s2, %s306
        %p308 = scmp.lt.s32.totalorder %s25, 1
        %s309 = scalar_select %p308, %s25, 1
        %s310 = smul.addr %s309, 8
        %s311 = scalar_lea.vmem %s3, %s310
        // Predicated region
        $region45: #{tpu_custom_call.1} parent=27 // pred_check
          %p312 = pneg %p107
        $region46: #{tpu_custom_call.1} parent=27 // pred_check_branch
          %314 = sbr.rel (%p312) target = $region48
        $region47: #{tpu_custom_call.1} parent=27 // pred_region
          _
        $region48: #{tpu_custom_call.1} parent=27 // pred_fallthru
          _
        // Predicated region
        $region49: #{tpu_custom_call.1} parent=27 // pred_check
          %p315 = pneg %p133
        $region50: #{tpu_custom_call.1} parent=27 // pred_check_branch
          %317 = sbr.rel (%p315) target = $region52
        $region51: #{tpu_custom_call.1} parent=27 // pred_region
          _
        $region52: #{tpu_custom_call.1} parent=27 // pred_fallthru
          _
      $region28: #{tpu_custom_call.1} parent=5 // pred_fallthru
        _
      %p318 = scmp.le.s32.totalorder 2, %s16
      // Predicated region
      $region53: #{tpu_custom_call.1} parent=5 // pred_check
        %p319 = pneg %p318
      $region54: #{tpu_custom_call.1} parent=5 // pred_check_branch
        %321 = sbr.rel (%p319) target = $region56
      $region55: #{tpu_custom_call.1} parent=5 // pred_region
        %s322 = ssub.s32 %s16, 2
        // Predicated region
        $region57: #{tpu_custom_call.1} parent=55 // pred_check
          %p323 = pneg %p113
        $region58: #{tpu_custom_call.1} parent=55 // pred_check_branch
          %325 = sbr.rel (%p323) target = $region60
        $region59: #{tpu_custom_call.1} parent=55 // pred_region
          %p326 = scmp.lt.s32.totalorder %s27, 1
          %s327 = scalar_select %p326, %s27, 1
          %s328 = smul.addr %s327, 8
          %s329 = scalar_lea.vmem %s2, %s328
        $region60: #{tpu_custom_call.1} parent=55 // pred_fallthru
          _
        // Predicated region
        $region61: #{tpu_custom_call.1} parent=55 // pred_check
          %p330 = pneg %p139
        $region62: #{tpu_custom_call.1} parent=55 // pred_check_branch
          %332 = sbr.rel (%p330) target = $region64
        $region63: #{tpu_custom_call.1} parent=55 // pred_region
          %p333 = scmp.lt.s32.totalorder %s27, 1
          %s334 = scalar_select %p333, %s27, 1
          %s335 = smul.addr %s334, 8
          %s336 = scalar_lea.vmem %s3, %s335
        $region64: #{tpu_custom_call.1} parent=55 // pred_fallthru
          _
      $region56: #{tpu_custom_call.1} parent=5 // pred_fallthru
        _
    $region6: #{tpu_custom_call.1} parent=1 // loop_footer
      %s20 = sadd.s32 1, %s16
    $region7: #{tpu_custom_call.1} parent=1 // loop_footer_branch
      %15 = sbr.rel target = $region3
    $region8: #{tpu_custom_call.1} parent=1 // loop_exit
      _
    %337 = vsyncpa [#allocation5], 1
    %s338 = scalar_lea.sflag [#allocation5], 1
    %339 = vsyncpa %s338, 1
    %340 = vsyncpa [#allocation7], 1
    %s341 = scalar_lea.sflag [#allocation7], 1
    %342 = vsyncpa %s341, 1

</llo_original>
